<compile_context>
chip_gen: v7x
topology: tpu7x:2x2x1
jax: 0.10.0
libtpu: 0.0.40
codegen_flags: <defaults>
</compile_context>

<pallas_src>
import functools

import jax
import jax.numpy as jnp
from jax.experimental import pallas as pl
from jax.experimental.pallas import tpu as pltpu


def _prelu(h, a):
    return jnp.where(h >= 0.0, h, a * h)


def _mlp_kernel(x_ref, w1_ref, b1_ref, w2_ref, b2_ref, w3_ref, b3_ref,
                a_ref, *rest, p, apply_dropout):
    # rest = (u1_ref, u2_ref, o_ref) in training mode, (o_ref,) in eval mode.
    if apply_dropout:
        u1_ref, u2_ref, o_ref = rest
    else:
        (o_ref,) = rest

    a_hidden = a_ref[0]          # shared PReLU slope of the hidden layers
    a_final = a_ref[1]           # final PReLU slope
    p_f = jnp.float32(p)
    scale = jnp.float32(1.0 / (1.0 - p)) if apply_dropout else jnp.float32(1.0)

    # ---- layer 1: Linear(156,128) + PReLU (+ Dropout) ----
    h = jnp.dot(x_ref[...], w1_ref[...], preferred_element_type=jnp.float32)
    h = _prelu(h + b1_ref[...], a_hidden)
    if apply_dropout:
        h = jnp.where(u1_ref[...] >= p_f, h * scale, 0.0)

    # ---- layer 2: Linear(128,128) + PReLU (+ Dropout) ----
    h = jnp.dot(h, w2_ref[...], preferred_element_type=jnp.float32)
    h = _prelu(h + b2_ref[...], a_hidden)
    if apply_dropout:
        h = jnp.where(u2_ref[...] >= p_f, h * scale, 0.0)

    # ---- output layer: Linear(128,1) + final PReLU ----
    out = jnp.dot(h, w3_ref[...], preferred_element_type=jnp.float32)
    out = _prelu(out + b3_ref[...], a_final)
    o_ref[...] = out.astype(o_ref.dtype)


def _pick_batch_tile(batch):
    for tb in (512, 256, 128, 64, 32, 16, 8):
        if batch % tb == 0:
            return tb
    return 8  # ragged batch -> pad up to a multiple of 8


def aimeetsai_forward(features, params, *, dropout_p=0.1, training=False,
                      rng_key=None, dropout_uniforms=None):
    """Fused Pallas forward of `aimeetsai` (default config). Returns {'output': [B,1]}."""
    x = features
    batch, in_dim = x.shape
    h1 = params["w1"].shape[1]
    h2 = params["w2"].shape[1]
    dtype = x.dtype

    # nn.Dropout semantics: active iff the module is in training mode.
    apply_dropout = bool(training) and float(dropout_p) > 0.0
    assert float(dropout_p) < 1.0, "dropout_p == 1.0 zeros everything (unsupported)"

    if apply_dropout:
        if dropout_uniforms is None:
            k1, k2 = jax.random.split(rng_key)
            u1 = jax.random.uniform(k1, (batch, h1), dtype=jnp.float32)
            u2 = jax.random.uniform(k2, (batch, h2), dtype=jnp.float32)
        else:
            u1, u2 = dropout_uniforms

    tb = _pick_batch_tile(batch)
    padded = pl.cdiv(batch, tb) * tb
    xp = x if padded == batch else jnp.pad(x, ((0, padded - batch), (0, 0)))
    if apply_dropout and padded != batch:
        u1 = jnp.pad(u1, ((0, padded - batch), (0, 0)))
        u2 = jnp.pad(u2, ((0, padded - batch), (0, 0)))

    b1 = params["b1"].reshape(1, h1).astype(jnp.float32)
    b2 = params["b2"].reshape(1, h2).astype(jnp.float32)
    b3 = params["b3"].reshape(1, 1).astype(jnp.float32)
    prelu_a = jnp.stack([jnp.asarray(params["a_hidden"], jnp.float32),
                         jnp.asarray(params["a_final"], jnp.float32)])

    in_specs = [
        pl.BlockSpec((tb, in_dim), lambda i: (i, 0)),        # x batch tile
        pl.BlockSpec((in_dim, h1), lambda i: (0, 0)),        # W1 (resident)
        pl.BlockSpec((1, h1), lambda i: (0, 0)),             # b1
        pl.BlockSpec((h1, h2), lambda i: (0, 0)),            # W2
        pl.BlockSpec((1, h2), lambda i: (0, 0)),             # b2
        pl.BlockSpec((h2, 1), lambda i: (0, 0)),             # W3
        pl.BlockSpec((1, 1), lambda i: (0, 0)),              # b3
        pl.BlockSpec(memory_space=pltpu.MemorySpace.SMEM),   # PReLU slopes [a_h, a_f]
    ]
    args = [xp, params["w1"], b1, params["w2"], b2, params["w3"], b3, prelu_a]
    if apply_dropout:
        in_specs += [pl.BlockSpec((tb, h1), lambda i: (i, 0)),   # uniforms layer 1
                     pl.BlockSpec((tb, h2), lambda i: (i, 0))]   # uniforms layer 2
        args += [u1, u2]

    out = pl.pallas_call(
        functools.partial(_mlp_kernel, p=float(dropout_p),
                          apply_dropout=apply_dropout),
        out_shape=jax.ShapeDtypeStruct((padded, 1), dtype),
        grid=(padded // tb,),
        in_specs=in_specs,
        out_specs=pl.BlockSpec((tb, 1), lambda i: (i, 0)),
        compiler_params=pltpu.CompilerParams(
            dimension_semantics=("parallel",)),
    )(*args)

    if padded != batch:
        out = out[:batch]
    return {"output": out}


def _ref_forward(x, params, *, dropout_p=0.1, dropout_uniforms=None):
    """Pure-JAX reference (same math, same externally-drawn dropout uniforms)."""
    def prelu(h, a):
        return jnp.where(h >= 0.0, h, a * h)

    h = prelu(x @ params["w1"] + params["b1"], params["a_hidden"])
    if dropout_uniforms is not None:
        h = jnp.where(dropout_uniforms[0] >= dropout_p, h / (1.0 - dropout_p), 0.0)
    h = prelu(h @ params["w2"] + params["b2"], params["a_hidden"])
    if dropout_uniforms is not None:
        h = jnp.where(dropout_uniforms[1] >= dropout_p, h / (1.0 - dropout_p), 0.0)
    out = prelu(h @ params["w3"] + params["b3"], params["a_final"])
    return out


if __name__ == "__main__":
    key = jax.random.PRNGKey(0)
    ks = jax.random.split(key, 10)
    B, IN, H1, H2 = 16, 156, 128, 128   # default config: input_dims=156, hidden=[128,128]
    P = 0.1                              # default dropout

    x = jax.random.normal(ks[0], (B, IN), jnp.float32)
    params = {
        "w1": jax.random.normal(ks[1], (IN, H1), jnp.float32) / jnp.sqrt(IN),
        "b1": 0.01 * jax.random.normal(ks[2], (H1,), jnp.float32),
        "w2": jax.random.normal(ks[3], (H1, H2), jnp.float32) / jnp.sqrt(H1),
        "b2": 0.01 * jax.random.normal(ks[4], (H2,), jnp.float32),
        "w3": jax.random.normal(ks[5], (H2, 1), jnp.float32) / jnp.sqrt(H2),
        "b3": 0.01 * jax.random.normal(ks[6], (1,), jnp.float32),
        "a_hidden": 0.25,   # nn.PReLU() default init, shared by the hidden layers
        "a_final": 0.25,    # separate final nn.PReLU()
    }

    # ---- eval mode: dropout inactive, deterministic ----
    out_eval = aimeetsai_forward(x, params, dropout_p=P, training=False)["output"]
    out_eval = jax.block_until_ready(out_eval)
    ref_eval = _ref_forward(x, params, dropout_p=P)
    assert out_eval.shape == (B, 1)
    err = float(jnp.max(jnp.abs(out_eval - ref_eval)))
    assert jnp.allclose(out_eval, ref_eval, rtol=3e-2, atol=3e-2), f"eval mismatch {err}"

    # ---- training mode: dropout active; same uniforms fed to kernel and reference ----
    u1 = jax.random.uniform(ks[7], (B, H1), jnp.float32)
    u2 = jax.random.uniform(ks[8], (B, H2), jnp.float32)
    out_tr = aimeetsai_forward(x, params, dropout_p=P, training=True,
                               dropout_uniforms=(u1, u2))["output"]
    out_tr = jax.block_until_ready(out_tr)
    ref_tr = _ref_forward(x, params, dropout_p=P, dropout_uniforms=(u1, u2))
    err = float(jnp.max(jnp.abs(out_tr - ref_tr)))
    assert jnp.allclose(out_tr, ref_tr, rtol=3e-2, atol=3e-2), f"train mismatch {err}"
    assert bool(jnp.all(jnp.isfinite(out_tr)))

    print("KERNEL_OK")
</pallas_src>

<mosaic_0001>
module attributes {stable_mosaic.version = 11 : i64} {
  func.func @_mlp_kernel(%arg0: i32, %arg1: memref<16x156xf32, #tpu.memory_space<vmem>>, %arg2: memref<156x128xf32, #tpu.memory_space<vmem>>, %arg3: memref<1x128xf32, #tpu.memory_space<vmem>>, %arg4: memref<128x128xf32, #tpu.memory_space<vmem>>, %arg5: memref<1x128xf32, #tpu.memory_space<vmem>>, %arg6: memref<128x1xf32, #tpu.memory_space<vmem>>, %arg7: memref<1x1xf32, #tpu.memory_space<vmem>>, %arg8: memref<2xf32, #tpu.memory_space<smem>>, %arg9: memref<16x1xf32, #tpu.memory_space<vmem>>) attributes {dimension_semantics = [#tpu.dimension_semantics<parallel>], iteration_bounds = array<i64: 1>, scalar_prefetch = 0 : i64, scratch_operands = 0 : i64, tpu.core_type = #tpu.core_type<tc>, window_params = [{transform_indices = @transform_0, window_bounds = array<i64: 16, 156>}, {pipeline_mode = #tpu.pipeline_mode<synchronous>, transform_indices = @transform_1, window_bounds = array<i64: 156, 128>}, {pipeline_mode = #tpu.pipeline_mode<synchronous>, transform_indices = @transform_2, window_bounds = array<i64: 1, 128>}, {pipeline_mode = #tpu.pipeline_mode<synchronous>, transform_indices = @transform_3, window_bounds = array<i64: 128, 128>}, {pipeline_mode = #tpu.pipeline_mode<synchronous>, transform_indices = @transform_4, window_bounds = array<i64: 1, 128>}, {pipeline_mode = #tpu.pipeline_mode<synchronous>, transform_indices = @transform_5, window_bounds = array<i64: 128, 1>}, {pipeline_mode = #tpu.pipeline_mode<synchronous>, transform_indices = @transform_6, window_bounds = array<i64: 1, 1>}, {transform_indices = @transform_7, window_bounds = array<i64: 2>}, {transform_indices = @transform_8, window_bounds = array<i64: 16, 1>}]} {
    %c0 = arith.constant 0 : index
    %0 = memref.load %arg8[%c0] : memref<2xf32, #tpu.memory_space<smem>>
    %c1 = arith.constant 1 : index
    %1 = memref.load %arg8[%c1] : memref<2xf32, #tpu.memory_space<smem>>
    %c0_0 = arith.constant 0 : index
    %c0_1 = arith.constant 0 : index
    %2 = vector.load %arg1[%c0_0, %c0_1] : memref<16x156xf32, #tpu.memory_space<vmem>>, vector<16x156xf32>
    %c0_2 = arith.constant 0 : index
    %c0_3 = arith.constant 0 : index
    %3 = vector.load %arg2[%c0_2, %c0_3] : memref<156x128xf32, #tpu.memory_space<vmem>>, vector<156x128xf32>
    %cst = arith.constant dense<0.000000e+00> : vector<16x128xf32>
    %4 = tpu.matmul %2, %3, %cst {dimension_numbers = #tpu.dot_dimension_numbers<[1], [0], [0], [1], [0, 0, 1, 1], [], []>} : vector<16x156xf32>, vector<156x128xf32>, vector<16x128xf32> -> vector<16x128xf32>
    %c0_4 = arith.constant 0 : index
    %c0_5 = arith.constant 0 : index
    %5 = vector.load %arg3[%c0_4, %c0_5] : memref<1x128xf32, #tpu.memory_space<vmem>>, vector<1x128xf32>
    %6 = vector.broadcast %5 : vector<1x128xf32> to vector<16x128xf32>
    %7 = arith.addf %4, %6 : vector<16x128xf32>
    %cst_6 = arith.constant 0.000000e+00 : f32
    %8 = vector.broadcast %cst_6 : f32 to vector<16x128xf32>
    %9 = arith.cmpf oge, %7, %8 : vector<16x128xf32>
    %10 = vector.broadcast %0 : f32 to vector<16x128xf32>
    %11 = arith.mulf %10, %7 : vector<16x128xf32>
    %12 = arith.select %9, %7, %11 : vector<16x128xi1>, vector<16x128xf32>
    %c0_7 = arith.constant 0 : index
    %c0_8 = arith.constant 0 : index
    %13 = vector.load %arg4[%c0_7, %c0_8] : memref<128x128xf32, #tpu.memory_space<vmem>>, vector<128x128xf32>
    %cst_9 = arith.constant dense<0.000000e+00> : vector<16x128xf32>
    %14 = tpu.matmul %12, %13, %cst_9 {dimension_numbers = #tpu.dot_dimension_numbers<[1], [0], [0], [1], [0, 0, 1, 1], [], []>} : vector<16x128xf32>, vector<128x128xf32>, vector<16x128xf32> -> vector<16x128xf32>
    %c0_10 = arith.constant 0 : index
    %c0_11 = arith.constant 0 : index
    %15 = vector.load %arg5[%c0_10, %c0_11] : memref<1x128xf32, #tpu.memory_space<vmem>>, vector<1x128xf32>
    %16 = vector.broadcast %15 : vector<1x128xf32> to vector<16x128xf32>
    %17 = arith.addf %14, %16 : vector<16x128xf32>
    %cst_12 = arith.constant 0.000000e+00 : f32
    %18 = vector.broadcast %cst_12 : f32 to vector<16x128xf32>
    %19 = arith.cmpf oge, %17, %18 : vector<16x128xf32>
    %20 = vector.broadcast %0 : f32 to vector<16x128xf32>
    %21 = arith.mulf %20, %17 : vector<16x128xf32>
    %22 = arith.select %19, %17, %21 : vector<16x128xi1>, vector<16x128xf32>
    %c0_13 = arith.constant 0 : index
    %c0_14 = arith.constant 0 : index
    %23 = vector.load %arg6[%c0_13, %c0_14] : memref<128x1xf32, #tpu.memory_space<vmem>>, vector<128x1xf32>
    %cst_15 = arith.constant dense<0.000000e+00> : vector<16x1xf32>
    %24 = tpu.matmul %22, %23, %cst_15 {dimension_numbers = #tpu.dot_dimension_numbers<[1], [0], [0], [1], [0, 0, 1, 1], [], []>} : vector<16x128xf32>, vector<128x1xf32>, vector<16x1xf32> -> vector<16x1xf32>
    %c0_16 = arith.constant 0 : index
    %c0_17 = arith.constant 0 : index
    %25 = vector.load %arg7[%c0_16, %c0_17] : memref<1x1xf32, #tpu.memory_space<vmem>>, vector<1x1xf32>
    %26 = vector.broadcast %25 : vector<1x1xf32> to vector<16x1xf32>
    %27 = arith.addf %24, %26 : vector<16x1xf32>
    %cst_18 = arith.constant 0.000000e+00 : f32
    %28 = vector.broadcast %cst_18 : f32 to vector<16x1xf32>
    %29 = arith.cmpf oge, %27, %28 : vector<16x1xf32>
    %30 = vector.broadcast %1 : f32 to vector<16x1xf32>
    %31 = arith.mulf %30, %27 : vector<16x1xf32>
    %32 = arith.select %29, %27, %31 : vector<16x1xi1>, vector<16x1xf32>
    %c0_19 = arith.constant 0 : index
    %c0_20 = arith.constant 0 : index
    %33 = vector.load %arg9[%c0_19, %c0_20] : memref<16x1xf32, #tpu.memory_space<vmem>>, vector<16x1xf32>
    tpu.vector_store %arg9[%c0_19, %c0_20], %32 {strides = array<i32>} : memref<16x1xf32, #tpu.memory_space<vmem>>, vector<16x1xf32>,
    return
  }
  func.func @transform_0(%arg0: i32) -> (i32, i32) {
    %c0_i32 = arith.constant 0 : i32
    %c0_i32_0 = arith.constant 0 : i32
    return %arg0, %c0_i32 : i32, i32
  }
  func.func @transform_1(%arg0: i32) -> (i32, i32) {
    %c0_i32 = arith.constant 0 : i32
    %c0_i32_0 = arith.constant 0 : i32
    %c0_i32_1 = arith.constant 0 : i32
    return %c0_i32, %c0_i32_0 : i32, i32
  }
  func.func @transform_2(%arg0: i32) -> (i32, i32) {
    %c0_i32 = arith.constant 0 : i32
    %c0_i32_0 = arith.constant 0 : i32
    %c0_i32_1 = arith.constant 0 : i32
    return %c0_i32, %c0_i32_0 : i32, i32
  }
  func.func @transform_3(%arg0: i32) -> (i32, i32) {
    %c0_i32 = arith.constant 0 : i32
    %c0_i32_0 = arith.constant 0 : i32
    %c0_i32_1 = arith.constant 0 : i32
    return %c0_i32, %c0_i32_0 : i32, i32
  }
  func.func @transform_4(%arg0: i32) -> (i32, i32) {
    %c0_i32 = arith.constant 0 : i32
    %c0_i32_0 = arith.constant 0 : i32
    %c0_i32_1 = arith.constant 0 : i32
    return %c0_i32, %c0_i32_0 : i32, i32
  }
  func.func @transform_5(%arg0: i32) -> (i32, i32) {
    %c0_i32 = arith.constant 0 : i32
    %c0_i32_0 = arith.constant 0 : i32
    %c0_i32_1 = arith.constant 0 : i32
    return %c0_i32, %c0_i32_0 : i32, i32
  }
  func.func @transform_6(%arg0: i32) -> (i32, i32) {
    %c0_i32 = arith.constant 0 : i32
    %c0_i32_0 = arith.constant 0 : i32
    %c0_i32_1 = arith.constant 0 : i32
    return %c0_i32, %c0_i32_0 : i32, i32
  }
  func.func @transform_7(%arg0: i32) -> i32 {
    %c0_i32 = arith.constant 0 : i32
    %c0_i32_0 = arith.constant 0 : i32
    return %c0_i32 : i32
  }
  func.func @transform_8(%arg0: i32) -> (i32, i32) {
    %c0_i32 = arith.constant 0 : i32
    %c0_i32_0 = arith.constant 0 : i32
    return %arg0, %c0_i32 : i32, i32
  }
}

</mosaic_0001>

<llo_original>
// kernel: tpu_custom_call.1
$region0: #{tpu_custom_call.1}
  #allocation0 [shape = 'u32[]', space=smem, size = 0x4, offset = 0x4, fixed_abs, tag = 'smem constant byte address 0x4 - core index']
  #allocation1 [shape = 'u32[144,128]{1,0:T(1,128)}', space=vmem, size = 0x12000, scoped, tag = 'internal scratch']
  #allocation2 [shape = 'f32[1,1]{1,0:T(1,128)S(1)}', space=vmem, size = 0x200, scoped, tag = 'scoped memory for tpu_custom_call.1']
  %s0 = inlined_call_operand.hbm [shape: f32[16,156], index: 0, kind: input, shape index: {}]
  %s1 = inlined_call_operand.hbm [shape: f32[156,128], index: 1, kind: input, shape index: {}]
  %s2 = inlined_call_operand.vmem [shape: f32[1,128], index: 2, kind: input, shape index: {}]
  %s3 = inlined_call_operand.vmem [shape: f32[128,128], index: 3, kind: input, shape index: {}]
  %s4 = inlined_call_operand.vmem [shape: f32[1,128], index: 4, kind: input, shape index: {}]
  %s5 = inlined_call_operand.vmem [shape: f32[128,1], index: 5, kind: input, shape index: {}]
  %s6 = inlined_call_operand.<no memory space> [shape: f32[1,1], index: 6, kind: input, shape index: {}]
  %s7 = inlined_call_operand.vmem [shape: f32[2], index: 7, kind: input, shape index: {}]
  %s8 = inlined_call_operand.vmem [shape: f32[16,1], index: 8, kind: output, shape index: {}]
  %s9 = sld [smem:[#allocation0]]
  $region54: #{tpu_custom_call.1} parent=0
    _
  %s11 = ssub.s32 1, %s9
  %s12 = scalar_select 0, %s11, %s9
  %v13 = vstv %s6
  %14 = vst [vmem:[#allocation2] sm:$0x1] %v13
  $region1: #{tpu_custom_call.1} parent=0
    #allocation3 [shape = 'u8[16384]{0}', space=vmem, size = 0x4000, scoped, tag = 'input window, operand 0, single buffered']
    #allocation4 [shape = 's32[1]{0}', space=sflag, size = 0x4, scoped, tag = 'scoped memory for tpu_custom_call.1']
    #allocation5 [shape = 's32[1]{0}', space=sflag, size = 0x4, scoped, tag = 'scoped memory for tpu_custom_call.1']
    #allocation6 [shape = 'u8[81920]{0}', space=vmem, size = 0x14000, scoped, tag = 'input window, operand 1, single buffered']
    #allocation7 [shape = 's32[1]{0}', space=sflag, size = 0x4, scoped, tag = 'scoped memory for tpu_custom_call.1']
    #allocation8 [shape = 'u8[512]{0}', space=smem, size = 0x200, scoped, tag = 'input window, operand 7, single buffered']
    %15 = vsyncpa [#allocation4], 0
    %16 = vsyncpa [#allocation7], 0
    %17 = vsyncpa [#allocation5], 0
    // Predicated region
    $region2: #{tpu_custom_call.1} parent=1 // pred_check
      _
    $region3: #{tpu_custom_call.1} parent=1 // pred_check_branch
      %19 = sbr.rel (0) target = $region5
    $region4: #{tpu_custom_call.1} parent=1 // pred_region
      %s21 = ssub.s32 512, 512
      %22 = vsyncadd [#allocation4], %s21
      %s23 = sshll.u32 [#allocation3], 4
      %s24 = int_to_ptr.vmem [resolvable:$true] %s23
      %29 = dma.hbm_to_vmem [thread:$0]  %s0, 512, %s24, [#allocation4], 256, 256, 16
    $region5: #{tpu_custom_call.1} parent=1 // pred_fallthru
      _
    // Predicated region
    $region6: #{tpu_custom_call.1} parent=1 // pred_check
      _
    $region7: #{tpu_custom_call.1} parent=1 // pred_check_branch
      %31 = sbr.rel (0) target = $region9
    $region8: #{tpu_custom_call.1} parent=1 // pred_region
      %s33 = ssub.s32 2560, 2560
      %34 = vsyncadd [#allocation7], %s33
      %s35 = sshll.u32 [#allocation6], 4
      %s36 = int_to_ptr.vmem [resolvable:$true] %s35
      %41 = dma.hbm_to_vmem [thread:$0]  %s1, 2560, %s36, [#allocation7], 128, 128, 8
    $region9: #{tpu_custom_call.1} parent=1 // pred_fallthru
      _
    // Predicated region
    $region10: #{tpu_custom_call.1} parent=1 // pred_check
      _
    $region11: #{tpu_custom_call.1} parent=1 // pred_check_branch
      %43 = sbr.rel (0) target = $region13
    $region12: #{tpu_custom_call.1} parent=1 // pred_region
      _
    $region13: #{tpu_custom_call.1} parent=1 // pred_fallthru
      _
    // Predicated region
    $region14: #{tpu_custom_call.1} parent=1 // pred_check
      _
    $region15: #{tpu_custom_call.1} parent=1 // pred_check_branch
      %45 = sbr.rel (0) target = $region17
    $region16: #{tpu_custom_call.1} parent=1 // pred_region
      _
    $region17: #{tpu_custom_call.1} parent=1 // pred_fallthru
      _
    // Predicated region
    $region18: #{tpu_custom_call.1} parent=1 // pred_check
      _
    $region19: #{tpu_custom_call.1} parent=1 // pred_check_branch
      %47 = sbr.rel (0) target = $region21
    $region20: #{tpu_custom_call.1} parent=1 // pred_region
      _
    $region21: #{tpu_custom_call.1} parent=1 // pred_fallthru
      _
    // Predicated region
    $region22: #{tpu_custom_call.1} parent=1 // pred_check
      _
    $region23: #{tpu_custom_call.1} parent=1 // pred_check_branch
      %49 = sbr.rel (0) target = $region25
    $region24: #{tpu_custom_call.1} parent=1 // pred_region
      _
    $region25: #{tpu_custom_call.1} parent=1 // pred_fallthru
      _
    // Predicated region
    $region26: #{tpu_custom_call.1} parent=1 // pred_check
      _
    $region27: #{tpu_custom_call.1} parent=1 // pred_check_branch
      %51 = sbr.rel (0) target = $region29
    $region28: #{tpu_custom_call.1} parent=1 // pred_region
      _
    $region29: #{tpu_custom_call.1} parent=1 // pred_fallthru
      _
    // Predicated region
    $region30: #{tpu_custom_call.1} parent=1 // pred_check
      _
    $region31: #{tpu_custom_call.1} parent=1 // pred_check_branch
      %53 = sbr.rel (0) target = $region33
    $region32: #{tpu_custom_call.1} parent=1 // pred_region
      %s55 = ssub.s32 16, 16
      %56 = vsyncadd [#allocation5], %s55
      %s58 = sshll.u32 %s7, 4
      %s59 = int_to_ptr.vmem [resolvable:$true] %s58
      %61 = dma.vmem_to_smem %s59, 16, [#allocation8], [#allocation5]
    $region33: #{tpu_custom_call.1} parent=1 // pred_fallthru
      _
    // Predicated region
    $region34: #{tpu_custom_call.1} parent=1 // pred_check
      _
    $region35: #{tpu_custom_call.1} parent=1 // pred_check_branch
      %63 = sbr.rel (0) target = $region37
    $region36: #{tpu_custom_call.1} parent=1 // pred_region
      %64 = dma.done [#allocation4], 512
    $region37: #{tpu_custom_call.1} parent=1 // pred_fallthru
      _
    // Predicated region
    $region38: #{tpu_custom_call.1} parent=1 // pred_check
      _
    $region39: #{tpu_custom_call.1} parent=1 // pred_check_branch
      %66 = sbr.rel (0) target = $region41
    $region40: #{tpu_custom_call.1} parent=1 // pred_region
      %67 = dma.done [#allocation7], 2560
    $region41: #{tpu_custom_call.1} parent=1 // pred_fallthru
      _
    // Predicated region
    $region42: #{tpu_custom_call.1} parent=1 // pred_check
      _
    $region43: #{tpu_custom_call.1} parent=1 // pred_check_branch
      %69 = sbr.rel (0) target = $region45
    $region44: #{tpu_custom_call.1} parent=1 // pred_region
      %70 = dma.done [#allocation5], 16
    $region45: #{tpu_custom_call.1} parent=1 // pred_fallthru
      _
    %71 = sfence
    %s72 = sld [smem:[#allocation8]]
    %s73 = sld [smem:[#allocation8 + $0x1]]
    %v74 = vld [vmem:[#allocation3] sm:$0xff]
    %v75 = vld [vmem:[#allocation3 + $0x8] sm:$0xff]
    %v76 = vld [vmem:[#allocation3 + $0x10] sm:$0xff]
    %v77 = vld [vmem:[#allocation3 + $0x18] sm:$0xff]
    %v78 = vld [vmem:[#allocation6] sm:$0xff]
    %v79 = vld [vmem:[#allocation6 + $0x8] sm:$0xff]
    %v80 = vld [vmem:[#allocation6 + $0x10] sm:$0xff]
    %v81 = vld [vmem:[#allocation6 + $0x18] sm:$0xff]
    %v82 = vld [vmem:[#allocation6 + $0x20] sm:$0xff]
    %v83 = vld [vmem:[#allocation6 + $0x28] sm:$0xff]
    %v84 = vld [vmem:[#allocation6 + $0x30] sm:$0xff]
    %v85 = vld [vmem:[#allocation6 + $0x38] sm:$0xff]
    %v86 = vld [vmem:[#allocation6 + $0x40] sm:$0xff]
    %v87 = vld [vmem:[#allocation6 + $0x48] sm:$0xff]
    %v88 = vld [vmem:[#allocation6 + $0x50] sm:$0xff]
    %v89 = vld [vmem:[#allocation6 + $0x58] sm:$0xff]
    %v90 = vld [vmem:[#allocation6 + $0x60] sm:$0xff]
    %v91 = vld [vmem:[#allocation6 + $0x68] sm:$0xff]
    %v92 = vld [vmem:[#allocation6 + $0x70] sm:$0xff]
    %v93 = vld [vmem:[#allocation6 + $0x78] sm:$0xff]
    %v94 = vld [vmem:[#allocation6 + $0x80] sm:$0xff]
    %v95 = vld [vmem:[#allocation6 + $0x88] sm:$0xff]
    %v96 = vld [vmem:[#allocation6 + $0x90] sm:$0xff]
    %v97 = vld [vmem:[#allocation6 + $0x98] sm:$0xf]
    %v98 = vld [vmem:[%s2] sm:$0x1]
    %v100 = vlaneseq
    %v101 = vshrl.u32 %v100, 7
    %v102 = vsub.s32 0, %v101
    %v103 = vrot.slane %v98, %v102
    %vm105 = vcmask 228352
    %v107 = vsel %vm105, %v75, 0
    %v110 = vsel %vm105, %v77, 0
    %vm112 = vcmask 1043456
    %v114 = vsel %vm112, %v97, 0
    %116 = vmatprep.subr.mxu0 0.0
    %117 = vmatpush1.msra.mxu0 %v78
    %118 = vmatprep.subr.mxu0 0.0
    %119 = vmatpush1.msra.mxu0 %v79
    %120 = vmatprep.subr.mxu0 0.0
    %121 = vmatpush1.msra.mxu0 %v80
    %122 = vmatprep.subr.mxu0 0.0
    %123 = vmatpush1.msra.mxu0 %v81
    %124 = vmatprep.subr.mxu0 0.0
    %125 = vmatpush1.msra.mxu0 %v82
    %126 = vmatprep.subr.mxu0 0.0
    %127 = vmatpush1.msra.mxu0 %v83
    %128 = vmatprep.subr.mxu0 0.0
    %129 = vmatpush1.msra.mxu0 %v84
    %130 = vmatprep.subr.mxu0 0.0
    %131 = vmatpush1.msra.mxu0 %v85
    %132 = vmatprep.subr.mxu0 0.0
    %133 = vmatpush1.msra.mxu0 %v86
    %134 = vmatprep.subr.mxu0 0.0
    %135 = vmatpush1.msra.mxu0 %v87
    %136 = vmatprep.subr.mxu0 0.0
    %137 = vmatpush1.msra.mxu0 %v88
    %138 = vmatprep.subr.mxu0 0.0
    %139 = vmatpush1.msra.mxu0 %v89
    %140 = vmatprep.subr.mxu0 0.0
    %141 = vmatpush1.msra.mxu0 %v90
    %142 = vmatprep.subr.mxu0 0.0
    %143 = vmatpush1.msra.mxu0 %v91
    %144 = vmatprep.subr.mxu0 0.0
    %145 = vmatpush1.msra.mxu0 %v92
    %146 = vmatprep.subr.mxu0 0.0
    %147 = vmatpush1.msra.mxu0 %v93
    %148 = vmatprep.subr.mxu0 0.0
    %149 = vmatpush1.msra.mxu0 %v94
    %150 = vmatprep.subr.mxu0 0.0
    %151 = vmatpush1.msra.mxu0 %v95
    %152 = vmatprep.subr.mxu0 0.0
    %153 = vmatpush1.msra.mxu0 %v96
    %154 = vmatprep.subr.mxu0 0.0
    %155 = vmatpush1.msra.mxu0 %v114
    %156 = vmatprep.subr.mxu0 0.0
    %157 = vmatpush1.msra.mxu0 0.0
    %158 = vmatprep.subr.mxu0 0.0
    %159 = vmatpush1.msra.mxu0 0.0
    %160 = vmatprep.subr.mxu0 0.0
    %161 = vmatpush1.msra.mxu0 0.0
    %162 = vmatprep.subr.mxu0 0.0
    %163 = vmatpush1.msra.mxu0 0.0
    %164 = vmatprep.subr.mxu0 0.0
    %165 = vmatpush1.msra.mxu0 0.0
    %166 = vmatprep.subr.mxu0 0.0
    %167 = vmatpush1.msra.mxu0 0.0
    %168 = vmatprep.subr.mxu0 0.0
    %169 = vmatpush1.msra.mxu0 0.0
    %170 = vmatprep.subr.mxu0 0.0
    %171 = vmatpush1.msra.mxu0 0.0
    %172 = vmatprep.subr.mxu0 0.0
    %173 = vmatpush1.msra.mxu0 0.0
    %174 = vmatprep.subr.mxu0 0.0
    %175 = vmatpush1.msra.mxu0 0.0
    %176 = vmatprep.subr.mxu0 0.0
    %177 = vmatpush1.msra.mxu0 0.0
    %178 = vmatprep.subr.mxu0 0.0
    %179 = vmatpush1.msra.mxu0 0.0
    %180 = vmatprep.mubr.f32.mxu0 %v107
    %181 = vmatmul.mubr.f32.gmra.mrb[0].mxu0 %v74
    %v182 = vpop.f32.mrb[0].mxu0
    %v183 = vadd.f32 %v103, %v182
    %v184 = vpop.f32.mrb[0].mxu0
    %185 = vmatprep.mubr.f32.mxu0 %v110
    %186 = vmatmul.mubr.f32.gmra.mrb[0].mxu0 %v76
    %v187 = vpop.f32.mrb[0].mxu0
    %v188 = vadd.f32 %v103, %v187
    %v189 = vpop.f32.mrb[0].mxu0
    %190 = vdwg.mxu0
    %vm191 = vcmp.ge.f32.partialorder %v183, 0.0
    %vm192 = vcmp.ge.f32.partialorder %v188, 0.0
    %v193 = vstv %s72
    %v194 = vmul.f32 %v193, %v183
    %v195 = vmul.f32 %v193, %v188
    %v196 = vsel %vm191, %v183, %v194
    %v197 = vsel %vm192, %v188, %v195
    %v198 = vld [vmem:[%s3] sm:$0xff]
    %v199 = vld [vmem:[%s3 + $0x8] sm:$0xff]
    %v200 = vld [vmem:[%s3 + $0x10] sm:$0xff]
    %v201 = vld [vmem:[%s3 + $0x18] sm:$0xff]
    %v202 = vld [vmem:[%s3 + $0x20] sm:$0xff]
    %v203 = vld [vmem:[%s3 + $0x28] sm:$0xff]
    %v204 = vld [vmem:[%s3 + $0x30] sm:$0xff]
    %v205 = vld [vmem:[%s3 + $0x38] sm:$0xff]
    %v206 = vld [vmem:[%s3 + $0x40] sm:$0xff]
    %v207 = vld [vmem:[%s3 + $0x48] sm:$0xff]
    %v208 = vld [vmem:[%s3 + $0x50] sm:$0xff]
    %v209 = vld [vmem:[%s3 + $0x58] sm:$0xff]
    %v210 = vld [vmem:[%s3 + $0x60] sm:$0xff]
    %v211 = vld [vmem:[%s3 + $0x68] sm:$0xff]
    %v212 = vld [vmem:[%s3 + $0x70] sm:$0xff]
    %v213 = vld [vmem:[%s3 + $0x78] sm:$0xff]
    %v214 = vld [vmem:[%s4] sm:$0x1]
    %v216 = vlaneseq
    %v217 = vshrl.u32 %v216, 7
    %v218 = vsub.s32 0, %v217
    %v219 = vrot.slane %v214, %v218
    %221 = vmatprep.subr.mxu0 0.0
    %222 = vmatpush1.msra.mxu0 %v198
    %223 = vmatprep.subr.mxu0 0.0
    %224 = vmatpush1.msra.mxu0 %v199
    %225 = vmatprep.subr.mxu0 0.0
    %226 = vmatpush1.msra.mxu0 %v200
    %227 = vmatprep.subr.mxu0 0.0
    %228 = vmatpush1.msra.mxu0 %v201
    %229 = vmatprep.subr.mxu0 0.0
    %230 = vmatpush1.msra.mxu0 %v202
    %231 = vmatprep.subr.mxu0 0.0
    %232 = vmatpush1.msra.mxu0 %v203
    %233 = vmatprep.subr.mxu0 0.0
    %234 = vmatpush1.msra.mxu0 %v204
    %235 = vmatprep.subr.mxu0 0.0
    %236 = vmatpush1.msra.mxu0 %v205
    %237 = vmatprep.subr.mxu0 0.0
    %238 = vmatpush1.msra.mxu0 %v206
    %239 = vmatprep.subr.mxu0 0.0
    %240 = vmatpush1.msra.mxu0 %v207
    %241 = vmatprep.subr.mxu0 0.0
    %242 = vmatpush1.msra.mxu0 %v208
    %243 = vmatprep.subr.mxu0 0.0
    %244 = vmatpush1.msra.mxu0 %v209
    %245 = vmatprep.subr.mxu0 0.0
    %246 = vmatpush1.msra.mxu0 %v210
    %247 = vmatprep.subr.mxu0 0.0
    %248 = vmatpush1.msra.mxu0 %v211
    %249 = vmatprep.subr.mxu0 0.0
    %250 = vmatpush1.msra.mxu0 %v212
    %251 = vmatprep.subr.mxu0 0.0
    %252 = vmatpush1.msra.mxu0 %v213
    %253 = vmatprep.subr.mxu0 0.0
    %254 = vmatpush1.msra.mxu0 0.0
    %255 = vmatprep.subr.mxu0 0.0
    %256 = vmatpush1.msra.mxu0 0.0
    %257 = vmatprep.subr.mxu0 0.0
    %258 = vmatpush1.msra.mxu0 0.0
    %259 = vmatprep.subr.mxu0 0.0
    %260 = vmatpush1.msra.mxu0 0.0
    %261 = vmatprep.subr.mxu0 0.0
    %262 = vmatpush1.msra.mxu0 0.0
    %263 = vmatprep.subr.mxu0 0.0
    %264 = vmatpush1.msra.mxu0 0.0
    %265 = vmatprep.subr.mxu0 0.0
    %266 = vmatpush1.msra.mxu0 0.0
    %267 = vmatprep.subr.mxu0 0.0
    %268 = vmatpush1.msra.mxu0 0.0
    %269 = vmatprep.subr.mxu0 0.0
    %270 = vmatpush1.msra.mxu0 0.0
    %271 = vmatprep.subr.mxu0 0.0
    %272 = vmatpush1.msra.mxu0 0.0
    %273 = vmatprep.subr.mxu0 0.0
    %274 = vmatpush1.msra.mxu0 0.0
    %275 = vmatprep.subr.mxu0 0.0
    %276 = vmatpush1.msra.mxu0 0.0
    %277 = vmatprep.subr.mxu0 0.0
    %278 = vmatpush1.msra.mxu0 0.0
    %279 = vmatprep.subr.mxu0 0.0
    %280 = vmatpush1.msra.mxu0 0.0
    %281 = vmatprep.subr.mxu0 0.0
    %282 = vmatpush1.msra.mxu0 0.0
    %283 = vmatprep.subr.mxu0 0.0
    %284 = vmatpush1.msra.mxu0 0.0
    %285 = vmatprep.mubr.f32.mxu0 0.0
    %286 = vmatmul.mubr.f32.gmra.mrb[0].mxu0 %v196
    %v287 = vpop.f32.mrb[0].mxu0
    %v288 = vadd.f32 %v219, %v287
    %v289 = vpop.f32.mrb[0].mxu0
    %290 = vmatprep.mubr.f32.mxu0 0.0
    %291 = vmatmul.mubr.f32.gmra.mrb[0].mxu0 %v197
    %v292 = vpop.f32.mrb[0].mxu0
    %v293 = vadd.f32 %v219, %v292
    %v294 = vpop.f32.mrb[0].mxu0
    %295 = vdwg.mxu0
    %vm296 = vcmp.ge.f32.partialorder %v288, 0.0
    %vm297 = vcmp.ge.f32.partialorder %v293, 0.0
    %v298 = vmul.f32 %v193, %v288
    %v299 = vmul.f32 %v193, %v293
    %v300 = vsel %vm296, %v288, %v298
    %v301 = vsel %vm297, %v293, %v299
    %v302 = vld [vmem:[%s5] sm:$0xff]
    %v303 = vld [vmem:[%s5 + $0x8] sm:$0xff]
    %v304 = vld [vmem:[%s5 + $0x10] sm:$0xff]
    %v305 = vld [vmem:[%s5 + $0x18] sm:$0xff]
    %v306 = vld [vmem:[%s5 + $0x20] sm:$0xff]
    %v307 = vld [vmem:[%s5 + $0x28] sm:$0xff]
    %v308 = vld [vmem:[%s5 + $0x30] sm:$0xff]
    %v309 = vld [vmem:[%s5 + $0x38] sm:$0xff]
    %v310 = vld [vmem:[%s5 + $0x40] sm:$0xff]
    %v311 = vld [vmem:[%s5 + $0x48] sm:$0xff]
    %v312 = vld [vmem:[%s5 + $0x50] sm:$0xff]
    %v313 = vld [vmem:[%s5 + $0x58] sm:$0xff]
    %v314 = vld [vmem:[%s5 + $0x60] sm:$0xff]
    %v315 = vld [vmem:[%s5 + $0x68] sm:$0xff]
    %v316 = vld [vmem:[%s5 + $0x70] sm:$0xff]
    %v317 = vld [vmem:[%s5 + $0x78] sm:$0xff]
    %v318 = vld [vmem:[#allocation2] sm:$0x1]
    %v320 = vlaneseq
    %v321 = vshrl.u32 %v320, 7
    %v322 = vsub.s32 0, %v321
    %v323 = vrot.slane %v318, %v322
    %325 = vmatprep.subr.mxu0 0.0
    %326 = vmatpush1.msra.mxu0 %v302
    %327 = vmatprep.subr.mxu0 0.0
    %328 = vmatpush1.msra.mxu0 %v303
    %329 = vmatprep.subr.mxu0 0.0
    %330 = vmatpush1.msra.mxu0 %v304
    %331 = vmatprep.subr.mxu0 0.0
    %332 = vmatpush1.msra.mxu0 %v305
    %333 = vmatprep.subr.mxu0 0.0
    %334 = vmatpush1.msra.mxu0 %v306
    %335 = vmatprep.subr.mxu0 0.0
    %336 = vmatpush1.msra.mxu0 %v307
    %337 = vmatprep.subr.mxu0 0.0
    %338 = vmatpush1.msra.mxu0 %v308
    %339 = vmatprep.subr.mxu0 0.0
    %340 = vmatpush1.msra.mxu0 %v309
    %341 = vmatprep.subr.mxu0 0.0
    %342 = vmatpush1.msra.mxu0 %v310
    %343 = vmatprep.subr.mxu0 0.0
    %344 = vmatpush1.msra.mxu0 %v311
    %345 = vmatprep.subr.mxu0 0.0
    %346 = vmatpush1.msra.mxu0 %v312
    %347 = vmatprep.subr.mxu0 0.0
    %348 = vmatpush1.msra.mxu0 %v313
    %349 = vmatprep.subr.mxu0 0.0
    %350 = vmatpush1.msra.mxu0 %v314
    %351 = vmatprep.subr.mxu0 0.0
    %352 = vmatpush1.msra.mxu0 %v315
    %353 = vmatprep.subr.mxu0 0.0
    %354 = vmatpush1.msra.mxu0 %v316
    %355 = vmatprep.subr.mxu0 0.0
    %356 = vmatpush1.msra.mxu0 %v317
    %357 = vmatprep.subr.mxu0 0.0
    %358 = vmatpush1.msra.mxu0 0.0
    %359 = vmatprep.subr.mxu0 0.0
    %360 = vmatpush1.msra.mxu0 0.0
    %361 = vmatprep.subr.mxu0 0.0
    %362 = vmatpush1.msra.mxu0 0.0
    %363 = vmatprep.subr.mxu0 0.0
    %364 = vmatpush1.msra.mxu0 0.0
    %365 = vmatprep.subr.mxu0 0.0
    %366 = vmatpush1.msra.mxu0 0.0
    %367 = vmatprep.subr.mxu0 0.0
    %368 = vmatpush1.msra.mxu0 0.0
    %369 = vmatprep.subr.mxu0 0.0
    %370 = vmatpush1.msra.mxu0 0.0
    %371 = vmatprep.subr.mxu0 0.0
    %372 = vmatpush1.msra.mxu0 0.0
    %373 = vmatprep.subr.mxu0 0.0
    %374 = vmatpush1.msra.mxu0 0.0
    %375 = vmatprep.subr.mxu0 0.0
    %376 = vmatpush1.msra.mxu0 0.0
    %377 = vmatprep.subr.mxu0 0.0
    %378 = vmatpush1.msra.mxu0 0.0
    %379 = vmatprep.subr.mxu0 0.0
    %380 = vmatpush1.msra.mxu0 0.0
    %381 = vmatprep.subr.mxu0 0.0
    %382 = vmatpush1.msra.mxu0 0.0
    %383 = vmatprep.subr.mxu0 0.0
    %384 = vmatpush1.msra.mxu0 0.0
    %385 = vmatprep.subr.mxu0 0.0
    %386 = vmatpush1.msra.mxu0 0.0
    %387 = vmatprep.subr.mxu0 0.0
    %388 = vmatpush1.msra.mxu0 0.0
    %389 = vmatprep.mubr.f32.mxu0 0.0
    %390 = vmatmul.mubr.f32.gmra.mrb[0].mxu0 %v300
    %v391 = vpop.f32.mrb[0].mxu0
    %v392 = vadd.f32 %v323, %v391
    %v393 = vpop.f32.mrb[0].mxu0
    %394 = vmatprep.mubr.f32.mxu0 0.0
    %395 = vmatmul.mubr.f32.gmra.mrb[0].mxu0 %v301
    %v396 = vpop.f32.mrb[0].mxu0
    %v397 = vadd.f32 %v323, %v396
    %v398 = vpop.f32.mrb[0].mxu0
    %399 = vdwg.mxu0
    %vm400 = vcmp.ge.f32.partialorder %v392, 0.0
    %vm401 = vcmp.ge.f32.partialorder %v397, 0.0
    %v402 = vstv %s73
    %v403 = vmul.f32 %v402, %v392
    %v404 = vmul.f32 %v402, %v397
    %v405 = vsel %vm400, %v392, %v403
    %v406 = vsel %vm401, %v397, %v404
    %vm407 = vcmask 7168
    %408 = vst.msk [vmem:[%s8] sm:$0xff] %vm407, %v405
    %409 = vst.msk [vmem:[%s8 + $0x8] sm:$0xff] %vm407, %v406
    // Predicated region
    $region46: #{tpu_custom_call.1} parent=1 // pred_check
      _
    $region47: #{tpu_custom_call.1} parent=1 // pred_check_branch
      %411 = sbr.rel (0) target = $region49
    $region48: #{tpu_custom_call.1} parent=1 // pred_region
      _
    $region49: #{tpu_custom_call.1} parent=1 // pred_fallthru
      _
    // Predicated region
    $region50: #{tpu_custom_call.1} parent=1 // pred_check
      _
    $region51: #{tpu_custom_call.1} parent=1 // pred_check_branch
      %413 = sbr.rel (0) target = $region53
    $region52: #{tpu_custom_call.1} parent=1 // pred_region
      _
    $region53: #{tpu_custom_call.1} parent=1 // pred_fallthru
      _
    %414 = vsyncpa [#allocation4], 1
    %415 = vsyncpa [#allocation7], 1
    %416 = vsyncpa [#allocation5], 1

</llo_original>
